<compile_context>
chip_gen: v5e
topology: v5e:2x2
jax: 0.10.0
libtpu: 0.0.40
codegen_flags: <defaults>
</compile_context>

<pallas_src>
import math

import jax
import jax.numpy as jnp
from jax.experimental import pallas as pl
from jax.experimental.pallas import tpu as pltpu

B, S, D = 2, 8, 32        # batch, seq, d_model (feature dim normalized over)
EPS = 1e-6

_VMEM = pl.BlockSpec(memory_space=pltpu.MemorySpace.VMEM)


# ---------------------------------------------------------------------------
# Pallas kernel
# ---------------------------------------------------------------------------
def _layernorm_kernel(x_ref, a_ref, b_ref, o_ref):
    # x_ref: (R, D) rows; a_ref/b_ref: (1, D) affine params (broadcast per row)
    x = x_ref[...]
    d = x.shape[-1]

    # torch LayerNorm in model.py:
    #   mean = x.mean(-1); std = x.std(-1)  (unbiased, /(D-1))
    #   a_2 * (x - mean) / (std + eps) + b_2
    mean = jnp.mean(x, axis=-1, keepdims=True)
    xc = x - mean
    var = jnp.sum(xc * xc, axis=-1, keepdims=True) * (1.0 / (d - 1))
    std = jnp.sqrt(var)

    # divide -> EUP reciprocal-multiply (keeps `std + eps` semantics)
    inv = pl.reciprocal(std + EPS, approx=True)
    o_ref[...] = a_ref[...] * (xc * inv) + b_ref[...]


# ---------------------------------------------------------------------------
# wrapper
# ---------------------------------------------------------------------------
def layer_norm(x, a, b):
    """LayerNorm over the last dim of x; a/b are (D,) scale/shift."""
    orig_shape = x.shape
    d = orig_shape[-1]
    rows = math.prod(orig_shape[:-1]) if len(orig_shape) > 1 else 1

    x2 = x.reshape(rows, d)
    a2 = a.reshape(1, d).astype(jnp.float32)
    b2 = b.reshape(1, d).astype(jnp.float32)

    out = pl.pallas_call(
        _layernorm_kernel,
        out_shape=jax.ShapeDtypeStruct((rows, d), jnp.float32),
        in_specs=[_VMEM, _VMEM, _VMEM],
        out_specs=_VMEM,
    )(x2, a2, b2)
    return out.reshape(orig_shape)


# ---------------------------------------------------------------------------
# pure-JAX reference (exact torch math, exact division)
# ---------------------------------------------------------------------------
def layer_norm_ref(x, a, b, eps=EPS):
    mean = jnp.mean(x, axis=-1, keepdims=True)
    var = jnp.sum((x - mean) ** 2, axis=-1, keepdims=True) / (x.shape[-1] - 1)
    std = jnp.sqrt(var)
    return a * (x - mean) / (std + eps) + b


if __name__ == "__main__":
    key = jax.random.PRNGKey(0)
    kx, ka, kb = jax.random.split(key, 3)

    x = jax.random.normal(kx, (B, S, D), jnp.float32)
    # module init is a=ones, b=zeros; perturb slightly to exercise the affine path
    a = jnp.ones((D,), jnp.float32) + 0.1 * jax.random.normal(ka, (D,), jnp.float32)
    b = 0.1 * jax.random.normal(kb, (D,), jnp.float32)

    out = layer_norm(x, a, b)
    out = jax.block_until_ready(out)

    ref = layer_norm_ref(x, a, b)
    assert out.shape == (B, S, D)
    assert bool(jnp.all(jnp.isfinite(out)))
    assert bool(jnp.allclose(out, ref, atol=1e-2, rtol=1e-2))

    print("KERNEL_OK")
</pallas_src>

<mosaic_0001>
module attributes {stable_mosaic.version = 11 : i64} {
  func.func @_layernorm_kernel(%arg0: memref<16x32xf32, #tpu.memory_space<vmem>>, %arg1: memref<1x32xf32, #tpu.memory_space<vmem>>, %arg2: memref<1x32xf32, #tpu.memory_space<vmem>>, %arg3: memref<16x32xf32, #tpu.memory_space<vmem>>) attributes {dimension_semantics = [], scalar_prefetch = 0 : i64, scratch_operands = 0 : i64, tpu.core_type = #tpu.core_type<tc>} {
    %c0 = arith.constant 0 : index
    %c0_0 = arith.constant 0 : index
    %0 = vector.load %arg0[%c0, %c0_0] : memref<16x32xf32, #tpu.memory_space<vmem>>, vector<16x32xf32>
    %cst = arith.constant dense<0.000000e+00> : vector<16xf32>
    %1 = vector.multi_reduction <add>, %0, %cst [1] : vector<16x32xf32> to vector<16xf32>
    %2 = vector.shape_cast %1 : vector<16xf32> to vector<16x1xf32>
    %cst_1 = arith.constant 3.200000e+01 : f32
    %3 = vector.broadcast %cst_1 : f32 to vector<16x1xf32>
    %4 = arith.divf %2, %3 : vector<16x1xf32>
    %5 = vector.broadcast %4 : vector<16x1xf32> to vector<16x32xf32>
    %6 = arith.subf %0, %5 : vector<16x32xf32>
    %7 = arith.mulf %6, %6 : vector<16x32xf32>
    %cst_2 = arith.constant dense<0.000000e+00> : vector<16xf32>
    %8 = vector.multi_reduction <add>, %7, %cst_2 [1] : vector<16x32xf32> to vector<16xf32>
    %9 = vector.shape_cast %8 : vector<16xf32> to vector<16x1xf32>
    %cst_3 = arith.constant 0.0322580636 : f32
    %10 = vector.broadcast %cst_3 : f32 to vector<16x1xf32>
    %11 = arith.mulf %9, %10 : vector<16x1xf32>
    %12 = math.sqrt %11 : vector<16x1xf32>
    %cst_4 = arith.constant 9.99999997E-7 : f32
    %13 = vector.broadcast %cst_4 : f32 to vector<16x1xf32>
    %14 = arith.addf %12, %13 : vector<16x1xf32>
    %15 = tpu.reciprocal %14 {approx = true} : vector<16x1xf32> -> vector<16x1xf32>
    %c0_5 = arith.constant 0 : index
    %c0_6 = arith.constant 0 : index
    %16 = vector.load %arg1[%c0_5, %c0_6] : memref<1x32xf32, #tpu.memory_space<vmem>>, vector<1x32xf32>
    %17 = vector.broadcast %15 : vector<16x1xf32> to vector<16x32xf32>
    %18 = arith.mulf %6, %17 : vector<16x32xf32>
    %19 = vector.broadcast %16 : vector<1x32xf32> to vector<16x32xf32>
    %20 = arith.mulf %19, %18 : vector<16x32xf32>
    %c0_7 = arith.constant 0 : index
    %c0_8 = arith.constant 0 : index
    %21 = vector.load %arg2[%c0_7, %c0_8] : memref<1x32xf32, #tpu.memory_space<vmem>>, vector<1x32xf32>
    %22 = vector.broadcast %21 : vector<1x32xf32> to vector<16x32xf32>
    %23 = arith.addf %20, %22 : vector<16x32xf32>
    %c0_9 = arith.constant 0 : index
    %c0_10 = arith.constant 0 : index
    %24 = vector.load %arg3[%c0_9, %c0_10] : memref<16x32xf32, #tpu.memory_space<vmem>>, vector<16x32xf32>
    tpu.vector_store %arg3[%c0_9, %c0_10], %23 {strides = array<i32>} : memref<16x32xf32, #tpu.memory_space<vmem>>, vector<16x32xf32>,
    return
  }
}

</mosaic_0001>

<llo_original>
// kernel: tpu_custom_call.1
$region0: #{tpu_custom_call.1}
  #allocation0 [shape = 'u32[]', space=smem, size = 0x4, offset = 0x4, fixed_abs, tag = 'smem constant byte address 0x4 - core index']
  #allocation1 [shape = 'u32[72,128]{1,0:T(1,128)}', space=vmem, size = 0x9000, scoped, tag = 'internal scratch']
  %s0 = inlined_call_operand.hbm [shape: f32[16,32], index: 0, kind: input, shape index: {}]
  %s1 = inlined_call_operand.hbm [shape: f32[1,32], index: 1, kind: input, shape index: {}]
  %s2 = inlined_call_operand.vmem [shape: f32[1,32], index: 2, kind: input, shape index: {}]
  %s3 = inlined_call_operand.hbm [shape: f32[16,32], index: 3, kind: output, shape index: {}]
  %s4 = sld [smem:[#allocation0]]
  $region30: #{tpu_custom_call.1} parent=0
    _
  %s6 = ssub.s32 1, %s4
  %s7 = scalar_select 0, %s6, %s4
  $region1: #{tpu_custom_call.1} parent=0
    #allocation2 [shape = 'u8[8192]{0}', space=vmem, size = 0x2000, scoped, tag = 'input window, operand 0, single buffered']
    #allocation3 [shape = 's32[1]{0}', space=sflag, size = 0x4, scoped, tag = 'scoped memory for tpu_custom_call.1']
    #allocation4 [shape = 's32[1]{0}', space=sflag, size = 0x4, scoped, tag = 'scoped memory for tpu_custom_call.1']
    #allocation5 [shape = 'u8[512]{0}', space=vmem, size = 0x400, scoped, tag = 'input window, operand 1, single buffered']
    #allocation6 [shape = 's32[1]{0}', space=sflag, size = 0x4, scoped, tag = 'scoped memory for tpu_custom_call.1']
    #allocation7 [shape = 'u8[8192]{0}', space=vmem, size = 0x2000, scoped, tag = 'output window, operand 0, single buffered']
    %8 = vsyncpa [#allocation3], 0
    %9 = vsyncpa [#allocation6], 0
    %10 = vsyncpa [#allocation4], 0
    // Predicated region
    $region2: #{tpu_custom_call.1} parent=1 // pred_check
      _
    $region3: #{tpu_custom_call.1} parent=1 // pred_check_branch
      %12 = sbr.rel (0) target = $region5
    $region4: #{tpu_custom_call.1} parent=1 // pred_region
      %14 = vsyncadd [#allocation3], 0
      %s15 = sshll.u32 %s0, 4
      %s16 = int_to_ptr.hbm [resolvable:$true] %s15
      %s17 = sshll.u32 [#allocation2], 4
      %s18 = int_to_ptr.vmem [resolvable:$true] %s17
      %23 = dma.hbm_to_vmem [thread:$0]  %s16, 256, %s18, [#allocation3], 128, 128, 8
    $region5: #{tpu_custom_call.1} parent=1 // pred_fallthru
      _
    // Predicated region
    $region6: #{tpu_custom_call.1} parent=1 // pred_check
      _
    $region7: #{tpu_custom_call.1} parent=1 // pred_check_branch
      %25 = sbr.rel (0) target = $region9
    $region8: #{tpu_custom_call.1} parent=1 // pred_region
      %27 = vsyncadd [#allocation6], 0
      %s29 = sshll.u32 %s1, 4
      %s30 = int_to_ptr.hbm [resolvable:$true] %s29
      %s31 = sshll.u32 [#allocation5], 4
      %s32 = int_to_ptr.vmem [resolvable:$true] %s31
      %34 = dma.hbm_to_vmem [thread:$0]  %s30, 16, %s32, [#allocation6]
    $region9: #{tpu_custom_call.1} parent=1 // pred_fallthru
      _
    // Predicated region
    $region10: #{tpu_custom_call.1} parent=1 // pred_check
      _
    $region11: #{tpu_custom_call.1} parent=1 // pred_check_branch
      %36 = sbr.rel (0) target = $region13
    $region12: #{tpu_custom_call.1} parent=1 // pred_region
      _
    $region13: #{tpu_custom_call.1} parent=1 // pred_fallthru
      _
    // Predicated region
    $region14: #{tpu_custom_call.1} parent=1 // pred_check
      _
    $region15: #{tpu_custom_call.1} parent=1 // pred_check_branch
      %38 = sbr.rel (0) target = $region17
    $region16: #{tpu_custom_call.1} parent=1 // pred_region
      %40 = dma.done [#allocation3], 256
    $region17: #{tpu_custom_call.1} parent=1 // pred_fallthru
      _
    // Predicated region
    $region18: #{tpu_custom_call.1} parent=1 // pred_check
      _
    $region19: #{tpu_custom_call.1} parent=1 // pred_check_branch
      %42 = sbr.rel (0) target = $region21
    $region20: #{tpu_custom_call.1} parent=1 // pred_region
      %44 = dma.done [#allocation6], 16
    $region21: #{tpu_custom_call.1} parent=1 // pred_fallthru
      _
    %v45 = vld [vmem:[#allocation2] sm:$0xff]
    %v46 = vld [vmem:[#allocation2 + $0x8] sm:$0xff]
    %vm47 = vcmask 261120
    %v48 = vsel %vm47, %v45, 0.0
    %49 = vadd.xlane.f32.xlu0 %v48
    %v50 = vpop.xlane.xlu0 %49
    %v51 = vsel %vm47, %v46, 0.0
    %52 = vadd.xlane.f32.xlu0 %v51
    %v53 = vpop.xlane.xlu0 %52
    %v54 = vrcp.pop 32.0
    %v55 = vmul.f32 32.0, %v54
    %v56 = vsub.f32 1.0, %v55
    %v57 = vmul.f32 %v54, %v56
    %v58 = vadd.f32 %v54, %v57
    %vm59 = vweird.f32 %v54
    %v60 = vsel %vm59, %v54, %v58
    %v61 = vmul.f32 %v50, %v60
    %v62 = vmul.f32 %v53, %v60
    %v63 = vsub.f32 %v45, %v61
    %v64 = vsub.f32 %v46, %v62
    %v65 = vmul.f32 %v63, %v63
    %v66 = vmul.f32 %v64, %v64
    %v67 = vsel %vm47, %v65, 0.0
    %68 = vadd.xlane.f32.xlu0 %v67
    %v69 = vpop.xlane.xlu0 %68
    %v70 = vsel %vm47, %v66, 0.0
    %71 = vadd.xlane.f32.xlu0 %v70
    %v72 = vpop.xlane.xlu0 %71
    %v73 = vmul.f32 %v69, 0.032258064
    %v74 = vmul.f32 %v72, 0.032258064
    %v75 = vrsqrt.pop %v73
    %v76 = vmul.f32 %v75, %v73
    %v77 = vmul.f32 %v76, %v75
    %v78 = vmul.f32 0.5, %v77
    %v79 = vsub.f32 1.5, %v78
    %v80 = vmul.f32 %v75, %v79
    %v81 = vmul.f32 %v73, %v80
    %vm82 = vcmp.eq.f32.partialorder %v73, inf
    %v83 = vsel %vm82, %v73, %v81
    %vm84 = vcmp.eq.f32.partialorder %v73, 0.0
    %v85 = vand.u32 %v73, 2147483648
    %v86 = vsel %vm84, %v85, %v83
    %v87 = vrsqrt.pop %v74
    %v88 = vmul.f32 %v87, %v74
    %v89 = vmul.f32 %v88, %v87
    %v90 = vmul.f32 0.5, %v89
    %v91 = vsub.f32 1.5, %v90
    %v92 = vmul.f32 %v87, %v91
    %v93 = vmul.f32 %v74, %v92
    %vm94 = vcmp.eq.f32.partialorder %v74, inf
    %v95 = vsel %vm94, %v74, %v93
    %vm96 = vcmp.eq.f32.partialorder %v74, 0.0
    %v97 = vand.u32 %v74, 2147483648
    %v98 = vsel %vm96, %v97, %v95
    %v99 = vadd.f32 %v86, 1e-06
    %v100 = vadd.f32 %v98, 1e-06
    %v101 = vrcp.pop %v99
    %v102 = vrcp.pop %v100
    %v103 = vld [vmem:[#allocation5] sm:$0x1]
    %v104 = vmul.f32 %v63, %v101
    %v105 = vmul.f32 %v64, %v102
    %v107 = vperm.slane %v103, 0
    %v109 = vmul.f32 %v107, %v104
    %v110 = vmul.f32 %v107, %v105
    %v111 = vld [vmem:[%s2] sm:$0x1]
    %v113 = vperm.slane %v111, 0
    %v115 = vadd.f32 %v109, %v113
    %v116 = vadd.f32 %v110, %v113
    %117 = vst.msk [vmem:[#allocation7] sm:$0xff] %vm47, %v115
    %118 = vst.msk [vmem:[#allocation7 + $0x8] sm:$0xff] %vm47, %v116
    // Predicated region
    $region22: #{tpu_custom_call.1} parent=1 // pred_check
      _
    $region23: #{tpu_custom_call.1} parent=1 // pred_check_branch
      %120 = sbr.rel (0) target = $region25
    $region24: #{tpu_custom_call.1} parent=1 // pred_region
      %122 = vsyncadd [#allocation4], 0
      %s123 = sshll.u32 [#allocation7], 4
      %s124 = int_to_ptr.vmem [resolvable:$true] %s123
      %s125 = sshll.u32 %s3, 4
      %s126 = int_to_ptr.hbm [resolvable:$true] %s125
      %131 = dma.vmem_to_hbm [thread:$0]  %s124, 256, %s126, [#allocation4], 128, 128, 8
    $region25: #{tpu_custom_call.1} parent=1 // pred_fallthru
      _
    // Predicated region
    $region26: #{tpu_custom_call.1} parent=1 // pred_check
      _
    $region27: #{tpu_custom_call.1} parent=1 // pred_check_branch
      %133 = sbr.rel (0) target = $region29
    $region28: #{tpu_custom_call.1} parent=1 // pred_region
      %135 = dma.done [#allocation4], 256
    $region29: #{tpu_custom_call.1} parent=1 // pred_fallthru
      _
    %136 = vsyncpa [#allocation3], 1
    %137 = vsyncpa [#allocation6], 1
    %138 = vsyncpa [#allocation4], 1

</llo_original>
